<compile_context>
chip_gen: v7x
topology: tpu7x:2x2x1
jax: 0.10.0
libtpu: 0.0.40
codegen_flags: <defaults>
</compile_context>

<pallas_src>
import jax
import jax.numpy as jnp
from jax import lax
from jax.experimental import pallas as pl
from jax.experimental.pallas import tpu as pltpu


def attn_kernel(hid_ref, enc_ref, wh_ref, we_ref, b_ref, wsc_ref, bias_ref,
                out_ref):
    # hid_ref : (Bt, H)        f32   decoder hidden for this batch tile
    # enc_ref : (S, Bt, H)     f32   encoder outputs (native layout)
    # wh_ref  : (H, H)         f32   (= W_attn[:, :H].T)
    # we_ref  : (H, H)         f32   (= W_attn[:, H:].T)
    # b_ref   : (1, H)         f32
    # wsc_ref : (1, 1, H)      f32   score weight as a row vector
    # bias_ref: (Bt, S)        f32   additive mask bias (0 or -1e12)
    # out_ref : (Bt, S)        f32
    hid = hid_ref[...]                                        # (Bt, H)
    wh = wh_ref[...]                                          # (H, H)
    we = we_ref[...]                                          # (H, H)
    b = b_ref[...]                                            # (1, H)
    wsc = wsc_ref[...]                                        # (1, 1, H)

    # hidden half of Linear(2H -> H), + bias (small: Bt x H, broadcast over S)
    hid_proj = jnp.dot(hid, wh, preferred_element_type=jnp.float32) + b

    # encoder half of Linear(2H -> H): contract last dim of the 3-D block
    # directly (no reshape -> no VMEM relayout copies).
    enc_proj = lax.dot_general(
        enc_ref[...], we,
        dimension_numbers=(((2,), (0,)), ((), ())),
        preferred_element_type=jnp.float32)                   # (S, Bt, H)

    energy = jnp.tanh(enc_proj + hid_proj[None, :, :])        # (S, Bt, H) EUP

    # score: Linear(H -> 1) as VPU multiply + lane reduction over H
    scores_sb = jnp.sum(energy * wsc, axis=-1)                # (S, Bt)

    # transpose only the tiny score matrix so softmax reduces on the lane
    # axis (S); add the precomputed mask bias.
    scores = scores_sb.T + bias_ref[...]                      # (Bt, S)

    # softmax over S (lane axis); exact divide keeps the 1e-5 tolerance
    m = jnp.max(scores, axis=-1, keepdims=True)
    e = jnp.exp(scores - m)
    denom = jnp.sum(e, axis=-1, keepdims=True)
    out_ref[...] = e / denom


def _pick_block_b(B):
    # Largest clean batch tile: only tile when the tile exactly divides B so
    # no ragged edge block is ever generated; otherwise keep the full batch.
    for cand in (512, 256, 128):
        if B % cand == 0:
            return cand
    return B


def attn_pallas(hidden, encoder_outputs, W_attn, b_attn, W_score,
                seq_mask=None):
    """hidden: (1,B,H), encoder_outputs: (S,B,H), W_attn: (H,2H),
    b_attn: (H,), W_score: (1,H), seq_mask: (B,S) bool or None.
    Returns (B, 1, S) float32."""
    S, B, H = encoder_outputs.shape

    # glue: layout / param prep (no transpose of the big encoder tensor)
    hid2 = hidden.reshape(B, H).astype(jnp.float32)
    enc = encoder_outputs.astype(jnp.float32)                 # (S, B, H)
    Wh = jnp.asarray(W_attn[:, :H].T, jnp.float32)            # (H, H)
    We = jnp.asarray(W_attn[:, H:].T, jnp.float32)            # (H, H)
    b2 = jnp.asarray(b_attn, jnp.float32).reshape(1, H)
    wsc = jnp.asarray(W_score, jnp.float32).reshape(1, 1, H)  # (1, 1, H)
    if seq_mask is None:
        bias = jnp.zeros((B, S), jnp.float32)
    else:
        bias = jnp.where(seq_mask, jnp.float32(-1000000000000.0),
                         jnp.float32(0.0))

    block_b = _pick_block_b(B)
    grid = (pl.cdiv(B, block_b),)

    out = pl.pallas_call(
        attn_kernel,
        out_shape=jax.ShapeDtypeStruct((B, S), jnp.float32),
        grid=grid,
        in_specs=[
            pl.BlockSpec((block_b, H), lambda i: (i, 0)),        # hidden
            pl.BlockSpec((S, block_b, H), lambda i: (0, i, 0)),  # enc outputs
            pl.BlockSpec((H, H), lambda i: (0, 0)),              # Wh
            pl.BlockSpec((H, H), lambda i: (0, 0)),              # We
            pl.BlockSpec((1, H), lambda i: (0, 0)),              # bias
            pl.BlockSpec((1, 1, H), lambda i: (0, 0, 0)),        # score weight
            pl.BlockSpec((block_b, S), lambda i: (i, 0)),        # mask bias
        ],
        out_specs=pl.BlockSpec((block_b, S), lambda i: (i, 0)),
        compiler_params=pltpu.CompilerParams(
            dimension_semantics=("parallel",)),
    )(hid2, enc, Wh, We, b2, wsc, bias)

    return out[:, None, :]                                    # (B, 1, S)


def attn_reference(hidden, encoder_outputs, W_attn, b_attn, W_score,
                   seq_mask=None):
    """Pure-JAX mirror of the PyTorch forward, for validation."""
    S, B, H = encoder_outputs.shape
    hid_rep = jnp.repeat(hidden, S, axis=0)                   # (S, B, H)
    energy_in = jnp.concatenate([hid_rep, encoder_outputs],
                                axis=2).reshape(-1, 2 * H)
    e = jnp.tanh(energy_in @ W_attn.T + b_attn)               # (S*B, H)
    sc = (e @ W_score.T).squeeze(-1).reshape(S, B).T          # (B, S)
    if seq_mask is not None:
        sc = jnp.where(seq_mask, -1000000000000.0, sc)
    return jax.nn.softmax(sc, axis=1)[:, None, :]


if __name__ == "__main__":
    B, S, H = 2, 8, 32

    key = jax.random.PRNGKey(0)
    k_h, k_e, k_w, k_b, k_s = jax.random.split(key, 5)

    hidden = jax.random.normal(k_h, (1, B, H), jnp.float32)
    encoder_outputs = jax.random.normal(k_e, (S, B, H), jnp.float32)

    # deterministic parameter init (nn.Linear shapes)
    W_attn = 0.1 * jax.random.normal(k_w, (H, 2 * H), jnp.float32)   # attn.weight
    b_attn = 0.1 * jax.random.normal(k_b, (H,), jnp.float32)         # attn.bias
    W_score = 0.1 * jax.random.normal(k_s, (1, H), jnp.float32)      # score.weight

    # deterministic seq_mask: mask tail positions per batch element
    lens = jnp.array([6, 8], jnp.int32)
    seq_mask = jnp.arange(S)[None, :] >= lens[:, None]                # (B, S) bool

    out = attn_pallas(hidden, encoder_outputs, W_attn, b_attn, W_score,
                      seq_mask)
    out = jax.block_until_ready(out)

    ref = attn_reference(hidden, encoder_outputs, W_attn, b_attn, W_score,
                         seq_mask)
    assert out.shape == (B, 1, S)
    assert jnp.allclose(out, ref, atol=1e-5, rtol=1e-5)

    print("KERNEL_OK")
</pallas_src>

<mosaic_0001>
module attributes {stable_mosaic.version = 11 : i64} {
  func.func @attn_kernel(%arg0: i32, %arg1: memref<2x32xf32, #tpu.memory_space<vmem>>, %arg2: memref<8x2x32xf32, #tpu.memory_space<vmem>>, %arg3: memref<32x32xf32, #tpu.memory_space<vmem>>, %arg4: memref<32x32xf32, #tpu.memory_space<vmem>>, %arg5: memref<1x32xf32, #tpu.memory_space<vmem>>, %arg6: memref<1x1x32xf32, #tpu.memory_space<vmem>>, %arg7: memref<2x8xf32, #tpu.memory_space<vmem>>, %arg8: memref<2x8xf32, #tpu.memory_space<vmem>>) attributes {dimension_semantics = [#tpu.dimension_semantics<parallel>], iteration_bounds = array<i64: 1>, scalar_prefetch = 0 : i64, scratch_operands = 0 : i64, tpu.core_type = #tpu.core_type<tc>, window_params = [{transform_indices = @transform_0, window_bounds = array<i64: 2, 32>}, {transform_indices = @transform_1, window_bounds = array<i64: 8, 2, 32>}, {pipeline_mode = #tpu.pipeline_mode<synchronous>, transform_indices = @transform_2, window_bounds = array<i64: 32, 32>}, {pipeline_mode = #tpu.pipeline_mode<synchronous>, transform_indices = @transform_3, window_bounds = array<i64: 32, 32>}, {pipeline_mode = #tpu.pipeline_mode<synchronous>, transform_indices = @transform_4, window_bounds = array<i64: 1, 32>}, {pipeline_mode = #tpu.pipeline_mode<synchronous>, transform_indices = @transform_5, window_bounds = array<i64: 1, 1, 32>}, {transform_indices = @transform_6, window_bounds = array<i64: 2, 8>}, {transform_indices = @transform_7, window_bounds = array<i64: 2, 8>}]} {
    %c0 = arith.constant 0 : index
    %c0_0 = arith.constant 0 : index
    %0 = vector.load %arg1[%c0, %c0_0] : memref<2x32xf32, #tpu.memory_space<vmem>>, vector<2x32xf32>
    %c0_1 = arith.constant 0 : index
    %c0_2 = arith.constant 0 : index
    %1 = vector.load %arg3[%c0_1, %c0_2] : memref<32x32xf32, #tpu.memory_space<vmem>>, vector<32x32xf32>
    %c0_3 = arith.constant 0 : index
    %c0_4 = arith.constant 0 : index
    %2 = vector.load %arg4[%c0_3, %c0_4] : memref<32x32xf32, #tpu.memory_space<vmem>>, vector<32x32xf32>
    %c0_5 = arith.constant 0 : index
    %c0_6 = arith.constant 0 : index
    %3 = vector.load %arg5[%c0_5, %c0_6] : memref<1x32xf32, #tpu.memory_space<vmem>>, vector<1x32xf32>
    %c0_7 = arith.constant 0 : index
    %c0_8 = arith.constant 0 : index
    %c0_9 = arith.constant 0 : index
    %4 = vector.load %arg6[%c0_7, %c0_8, %c0_9] : memref<1x1x32xf32, #tpu.memory_space<vmem>>, vector<1x1x32xf32>
    %cst = arith.constant dense<0.000000e+00> : vector<2x32xf32>
    %5 = tpu.matmul %0, %1, %cst {dimension_numbers = #tpu.dot_dimension_numbers<[1], [0], [0], [1], [0, 0, 1, 1], [], []>} : vector<2x32xf32>, vector<32x32xf32>, vector<2x32xf32> -> vector<2x32xf32>
    %6 = vector.broadcast %3 : vector<1x32xf32> to vector<2x32xf32>
    %7 = arith.addf %5, %6 : vector<2x32xf32>
    %c0_10 = arith.constant 0 : index
    %c0_11 = arith.constant 0 : index
    %c0_12 = arith.constant 0 : index
    %8 = vector.load %arg2[%c0_10, %c0_11, %c0_12] : memref<8x2x32xf32, #tpu.memory_space<vmem>>, vector<8x2x32xf32>
    %cst_13 = arith.constant dense<0.000000e+00> : vector<8x2x32xf32>
    %9 = tpu.matmul %8, %2, %cst_13 {dimension_numbers = #tpu.dot_dimension_numbers<[2], [0], [0, 1], [1], [0, 0, 0, 1, 1, 1], [], []>} : vector<8x2x32xf32>, vector<32x32xf32>, vector<8x2x32xf32> -> vector<8x2x32xf32>
    %10 = vector.shape_cast %7 : vector<2x32xf32> to vector<1x2x32xf32>
    %11 = vector.broadcast %10 : vector<1x2x32xf32> to vector<8x2x32xf32>
    %12 = arith.addf %9, %11 : vector<8x2x32xf32>
    %13 = math.tanh %12 : vector<8x2x32xf32>
    %14 = vector.broadcast %4 : vector<1x1x32xf32> to vector<8x2x32xf32>
    %15 = arith.mulf %13, %14 : vector<8x2x32xf32>
    %cst_14 = arith.constant dense<0.000000e+00> : vector<8x2xf32>
    %16 = vector.multi_reduction <add>, %15, %cst_14 [2] : vector<8x2x32xf32> to vector<8x2xf32>
    %17 = tpu.transpose %16, [1, 0] : vector<8x2xf32> -> vector<2x8xf32>
    %c0_15 = arith.constant 0 : index
    %c0_16 = arith.constant 0 : index
    %18 = vector.load %arg7[%c0_15, %c0_16] : memref<2x8xf32, #tpu.memory_space<vmem>>, vector<2x8xf32>
    %19 = arith.addf %17, %18 : vector<2x8xf32>
    %cst_17 = arith.constant dense<0xFF800000> : vector<2xf32>
    %20 = vector.multi_reduction <maximumf>, %19, %cst_17 [1] : vector<2x8xf32> to vector<2xf32>
    %21 = vector.shape_cast %20 : vector<2xf32> to vector<2x1xf32>
    %22 = vector.broadcast %21 : vector<2x1xf32> to vector<2x8xf32>
    %23 = arith.subf %19, %22 : vector<2x8xf32>
    %24 = math.exp %23 : vector<2x8xf32>
    %cst_18 = arith.constant dense<0.000000e+00> : vector<2xf32>
    %25 = vector.multi_reduction <add>, %24, %cst_18 [1] : vector<2x8xf32> to vector<2xf32>
    %26 = vector.shape_cast %25 : vector<2xf32> to vector<2x1xf32>
    %27 = vector.broadcast %26 : vector<2x1xf32> to vector<2x8xf32>
    %28 = arith.divf %24, %27 : vector<2x8xf32>
    %c0_19 = arith.constant 0 : index
    %c0_20 = arith.constant 0 : index
    %29 = vector.load %arg8[%c0_19, %c0_20] : memref<2x8xf32, #tpu.memory_space<vmem>>, vector<2x8xf32>
    tpu.vector_store %arg8[%c0_19, %c0_20], %28 {strides = array<i32>} : memref<2x8xf32, #tpu.memory_space<vmem>>, vector<2x8xf32>,
    return
  }
  func.func @transform_0(%arg0: i32) -> (i32, i32) {
    %c0_i32 = arith.constant 0 : i32
    %c0_i32_0 = arith.constant 0 : i32
    return %arg0, %c0_i32 : i32, i32
  }
  func.func @transform_1(%arg0: i32) -> (i32, i32, i32) {
    %c0_i32 = arith.constant 0 : i32
    %c0_i32_0 = arith.constant 0 : i32
    %c0_i32_1 = arith.constant 0 : i32
    return %c0_i32, %arg0, %c0_i32_0 : i32, i32, i32
  }
  func.func @transform_2(%arg0: i32) -> (i32, i32) {
    %c0_i32 = arith.constant 0 : i32
    %c0_i32_0 = arith.constant 0 : i32
    %c0_i32_1 = arith.constant 0 : i32
    return %c0_i32, %c0_i32_0 : i32, i32
  }
  func.func @transform_3(%arg0: i32) -> (i32, i32) {
    %c0_i32 = arith.constant 0 : i32
    %c0_i32_0 = arith.constant 0 : i32
    %c0_i32_1 = arith.constant 0 : i32
    return %c0_i32, %c0_i32_0 : i32, i32
  }
  func.func @transform_4(%arg0: i32) -> (i32, i32) {
    %c0_i32 = arith.constant 0 : i32
    %c0_i32_0 = arith.constant 0 : i32
    %c0_i32_1 = arith.constant 0 : i32
    return %c0_i32, %c0_i32_0 : i32, i32
  }
  func.func @transform_5(%arg0: i32) -> (i32, i32, i32) {
    %c0_i32 = arith.constant 0 : i32
    %c0_i32_0 = arith.constant 0 : i32
    %c0_i32_1 = arith.constant 0 : i32
    %c0_i32_2 = arith.constant 0 : i32
    return %c0_i32, %c0_i32_0, %c0_i32_1 : i32, i32, i32
  }
  func.func @transform_6(%arg0: i32) -> (i32, i32) {
    %c0_i32 = arith.constant 0 : i32
    %c0_i32_0 = arith.constant 0 : i32
    return %arg0, %c0_i32 : i32, i32
  }
  func.func @transform_7(%arg0: i32) -> (i32, i32) {
    %c0_i32 = arith.constant 0 : i32
    %c0_i32_0 = arith.constant 0 : i32
    return %arg0, %c0_i32 : i32, i32
  }
}

</mosaic_0001>

<llo_original>
// kernel: tpu_custom_call.1
$region0: #{tpu_custom_call.1}
  #allocation0 [shape = 'u32[]', space=smem, size = 0x4, offset = 0x4, fixed_abs, tag = 'smem constant byte address 0x4 - core index']
  #allocation1 [shape = 'u32[144,128]{1,0:T(1,128)}', space=vmem, size = 0x12000, scoped, tag = 'internal scratch']
  %s0 = inlined_call_operand.hbm [shape: f32[2,32], index: 0, kind: input, shape index: {}]
  %s1 = inlined_call_operand.hbm [shape: f32[8,2,32], index: 1, kind: input, shape index: {}]
  %s2 = inlined_call_operand.hbm [shape: f32[32,32], index: 2, kind: input, shape index: {}]
  %s3 = inlined_call_operand.hbm [shape: f32[32,32], index: 3, kind: input, shape index: {}]
  %s4 = inlined_call_operand.vmem [shape: f32[1,32], index: 4, kind: input, shape index: {}]
  %s5 = inlined_call_operand.vmem [shape: f32[1,1,32], index: 5, kind: input, shape index: {}]
  %s6 = inlined_call_operand.vmem [shape: f32[2,8], index: 6, kind: input, shape index: {}]
  %s7 = inlined_call_operand.hbm [shape: f32[2,8], index: 7, kind: output, shape index: {}]
  %s8 = sld [smem:[#allocation0]]
  $region54: #{tpu_custom_call.1} parent=0
    _
  %s10 = ssub.s32 1, %s8
  %s11 = scalar_select 0, %s10, %s8
  $region1: #{tpu_custom_call.1} parent=0
    #allocation2 [shape = 'u8[1024]{0}', space=vmem, size = 0x400, scoped, tag = 'input window, operand 0, single buffered']
    #allocation3 [shape = 's32[1]{0}', space=sflag, size = 0x4, scoped, tag = 'scoped memory for tpu_custom_call.1']
    #allocation4 [shape = 's32[1]{0}', space=sflag, size = 0x4, scoped, tag = 'scoped memory for tpu_custom_call.1']
    #allocation5 [shape = 'u8[8192]{0}', space=vmem, size = 0x2000, scoped, tag = 'input window, operand 1, single buffered']
    #allocation6 [shape = 's32[1]{0}', space=sflag, size = 0x4, scoped, tag = 'scoped memory for tpu_custom_call.1']
    #allocation7 [shape = 'u8[16384]{0}', space=vmem, size = 0x4000, scoped, tag = 'input window, operand 2, single buffered']
    #allocation8 [shape = 'u8[16384]{0}', space=vmem, size = 0x4000, scoped, tag = 'input window, operand 3, single buffered']
    #allocation9 [shape = 's32[1]{0}', space=sflag, size = 0x4, scoped, tag = 'scoped memory for tpu_custom_call.1']
    #allocation10 [shape = 'u8[1024]{0}', space=vmem, size = 0x400, scoped, tag = 'output window, operand 0, single buffered']
    %12 = vsyncpa [#allocation3], 0
    %13 = vsyncpa [#allocation6], 0
    %14 = vsyncpa [#allocation9], 0
    %15 = vsyncpa [#allocation4], 0
    // Predicated region
    $region2: #{tpu_custom_call.1} parent=1 // pred_check
      _
    $region3: #{tpu_custom_call.1} parent=1 // pred_check_branch
      %17 = sbr.rel (0) target = $region5
    $region4: #{tpu_custom_call.1} parent=1 // pred_region
      %s19 = ssub.s32 32, 32
      %20 = vsyncadd [#allocation3], %s19
      %s22 = sshll.u32 [#allocation2], 4
      %s23 = int_to_ptr.vmem [resolvable:$true] %s22
      %25 = dma.hbm_to_vmem [thread:$0]  %s0, 32, %s23, [#allocation3]
    $region5: #{tpu_custom_call.1} parent=1 // pred_fallthru
      _
    // Predicated region
    $region6: #{tpu_custom_call.1} parent=1 // pred_check
      _
    $region7: #{tpu_custom_call.1} parent=1 // pred_check_branch
      %27 = sbr.rel (0) target = $region9
    $region8: #{tpu_custom_call.1} parent=1 // pred_region
      %s29 = ssub.s32 256, 256
      %30 = vsyncadd [#allocation6], %s29
      %s31 = sshll.u32 [#allocation5], 4
      %s32 = int_to_ptr.vmem [resolvable:$true] %s31
      %37 = dma.hbm_to_vmem [thread:$0]  %s1, 256, %s32, [#allocation6], 32, 32, 2
    $region9: #{tpu_custom_call.1} parent=1 // pred_fallthru
      _
    // Predicated region
    $region10: #{tpu_custom_call.1} parent=1 // pred_check
      _
    $region11: #{tpu_custom_call.1} parent=1 // pred_check_branch
      %39 = sbr.rel (0) target = $region13
    $region12: #{tpu_custom_call.1} parent=1 // pred_region
      %s41 = ssub.s32 512, 512
      %42 = vsyncadd [#allocation6], %s41
      %s43 = sshll.u32 [#allocation7], 4
      %s44 = int_to_ptr.vmem [resolvable:$true] %s43
      %49 = dma.hbm_to_vmem [thread:$0]  %s2, 512, %s44, [#allocation6], 128, 128, 8
    $region13: #{tpu_custom_call.1} parent=1 // pred_fallthru
      _
    // Predicated region
    $region14: #{tpu_custom_call.1} parent=1 // pred_check
      _
    $region15: #{tpu_custom_call.1} parent=1 // pred_check_branch
      %51 = sbr.rel (0) target = $region17
    $region16: #{tpu_custom_call.1} parent=1 // pred_region
      %s53 = ssub.s32 512, 512
      %54 = vsyncadd [#allocation9], %s53
      %s55 = sshll.u32 [#allocation8], 4
      %s56 = int_to_ptr.vmem [resolvable:$true] %s55
      %61 = dma.hbm_to_vmem [thread:$0]  %s3, 512, %s56, [#allocation9], 128, 128, 8
    $region17: #{tpu_custom_call.1} parent=1 // pred_fallthru
      _
    // Predicated region
    $region18: #{tpu_custom_call.1} parent=1 // pred_check
      _
    $region19: #{tpu_custom_call.1} parent=1 // pred_check_branch
      %63 = sbr.rel (0) target = $region21
    $region20: #{tpu_custom_call.1} parent=1 // pred_region
      _
    $region21: #{tpu_custom_call.1} parent=1 // pred_fallthru
      _
    // Predicated region
    $region22: #{tpu_custom_call.1} parent=1 // pred_check
      _
    $region23: #{tpu_custom_call.1} parent=1 // pred_check_branch
      %65 = sbr.rel (0) target = $region25
    $region24: #{tpu_custom_call.1} parent=1 // pred_region
      _
    $region25: #{tpu_custom_call.1} parent=1 // pred_fallthru
      _
    // Predicated region
    $region26: #{tpu_custom_call.1} parent=1 // pred_check
      _
    $region27: #{tpu_custom_call.1} parent=1 // pred_check_branch
      %67 = sbr.rel (0) target = $region29
    $region28: #{tpu_custom_call.1} parent=1 // pred_region
      _
    $region29: #{tpu_custom_call.1} parent=1 // pred_fallthru
      _
    // Predicated region
    $region30: #{tpu_custom_call.1} parent=1 // pred_check
      _
    $region31: #{tpu_custom_call.1} parent=1 // pred_check_branch
      %69 = sbr.rel (0) target = $region33
    $region32: #{tpu_custom_call.1} parent=1 // pred_region
      %70 = dma.done [#allocation3], 32
    $region33: #{tpu_custom_call.1} parent=1 // pred_fallthru
      _
    // Predicated region
    $region34: #{tpu_custom_call.1} parent=1 // pred_check
      _
    $region35: #{tpu_custom_call.1} parent=1 // pred_check_branch
      %72 = sbr.rel (0) target = $region37
    $region36: #{tpu_custom_call.1} parent=1 // pred_region
      %73 = dma.done [#allocation6], 256
    $region37: #{tpu_custom_call.1} parent=1 // pred_fallthru
      _
    // Predicated region
    $region38: #{tpu_custom_call.1} parent=1 // pred_check
      _
    $region39: #{tpu_custom_call.1} parent=1 // pred_check_branch
      %75 = sbr.rel (0) target = $region41
    $region40: #{tpu_custom_call.1} parent=1 // pred_region
      %76 = dma.done [#allocation6], 512
    $region41: #{tpu_custom_call.1} parent=1 // pred_fallthru
      _
    // Predicated region
    $region42: #{tpu_custom_call.1} parent=1 // pred_check
      _
    $region43: #{tpu_custom_call.1} parent=1 // pred_check_branch
      %78 = sbr.rel (0) target = $region45
    $region44: #{tpu_custom_call.1} parent=1 // pred_region
      %79 = dma.done [#allocation9], 512
    $region45: #{tpu_custom_call.1} parent=1 // pred_fallthru
      _
    %v80 = vld [vmem:[#allocation2] sm:$0x3]
    %v81 = vld [vmem:[#allocation7] sm:$0xff]
    %v82 = vld [vmem:[#allocation7 + $0x8] sm:$0xff]
    %v83 = vld [vmem:[#allocation7 + $0x10] sm:$0xff]
    %v84 = vld [vmem:[#allocation7 + $0x18] sm:$0xff]
    %v85 = vld [vmem:[#allocation8] sm:$0xff]
    %v86 = vld [vmem:[#allocation8 + $0x8] sm:$0xff]
    %v87 = vld [vmem:[#allocation8 + $0x10] sm:$0xff]
    %v88 = vld [vmem:[#allocation8 + $0x18] sm:$0xff]
    %v89 = vld [vmem:[%s4] sm:$0x1]
    %v90 = vld [vmem:[%s5] sm:$0x1]
    %v92 = vlaneseq
    %v93 = vshrl.u32 %v92, 7
    %v94 = vsub.s32 0, %v93
    %v95 = vrot.slane %v89, %v94
    %vm97 = vcmask 261120
    %v99 = vsel %vm97, %v80, 0
    %101 = vmatprep.subr.mxu0 0.0
    %102 = vmatpush1.msra.mxu0 %v81
    %103 = vmatprep.subr.mxu0 0.0
    %104 = vmatpush1.msra.mxu0 %v82
    %105 = vmatprep.subr.mxu0 0.0
    %106 = vmatpush1.msra.mxu0 %v83
    %107 = vmatprep.subr.mxu0 0.0
    %108 = vmatpush1.msra.mxu0 %v84
    %109 = vmatprep.subr.mxu0 0.0
    %110 = vmatpush1.msra.mxu0 0.0
    %111 = vmatprep.subr.mxu0 0.0
    %112 = vmatpush1.msra.mxu0 0.0
    %113 = vmatprep.subr.mxu0 0.0
    %114 = vmatpush1.msra.mxu0 0.0
    %115 = vmatprep.subr.mxu0 0.0
    %116 = vmatpush1.msra.mxu0 0.0
    %117 = vmatprep.subr.mxu0 0.0
    %118 = vmatpush1.msra.mxu0 0.0
    %119 = vmatprep.subr.mxu0 0.0
    %120 = vmatpush1.msra.mxu0 0.0
    %121 = vmatprep.subr.mxu0 0.0
    %122 = vmatpush1.msra.mxu0 0.0
    %123 = vmatprep.subr.mxu0 0.0
    %124 = vmatpush1.msra.mxu0 0.0
    %125 = vmatprep.subr.mxu0 0.0
    %126 = vmatpush1.msra.mxu0 0.0
    %127 = vmatprep.subr.mxu0 0.0
    %128 = vmatpush1.msra.mxu0 0.0
    %129 = vmatprep.subr.mxu0 0.0
    %130 = vmatpush1.msra.mxu0 0.0
    %131 = vmatprep.subr.mxu0 0.0
    %132 = vmatpush1.msra.mxu0 0.0
    %133 = vmatprep.subr.mxu0 0.0
    %134 = vmatpush1.msra.mxu0 0.0
    %135 = vmatprep.subr.mxu0 0.0
    %136 = vmatpush1.msra.mxu0 0.0
    %137 = vmatprep.subr.mxu0 0.0
    %138 = vmatpush1.msra.mxu0 0.0
    %139 = vmatprep.subr.mxu0 0.0
    %140 = vmatpush1.msra.mxu0 0.0
    %141 = vmatprep.subr.mxu0 0.0
    %142 = vmatpush1.msra.mxu0 0.0
    %143 = vmatprep.subr.mxu0 0.0
    %144 = vmatpush1.msra.mxu0 0.0
    %145 = vmatprep.subr.mxu0 0.0
    %146 = vmatpush1.msra.mxu0 0.0
    %147 = vmatprep.subr.mxu0 0.0
    %148 = vmatpush1.msra.mxu0 0.0
    %149 = vmatprep.subr.mxu0 0.0
    %150 = vmatpush1.msra.mxu0 0.0
    %151 = vmatprep.subr.mxu0 0.0
    %152 = vmatpush1.msra.mxu0 0.0
    %153 = vmatprep.subr.mxu0 0.0
    %154 = vmatpush1.msra.mxu0 0.0
    %155 = vmatprep.subr.mxu0 0.0
    %156 = vmatpush1.msra.mxu0 0.0
    %157 = vmatprep.subr.mxu0 0.0
    %158 = vmatpush1.msra.mxu0 0.0
    %159 = vmatprep.subr.mxu0 0.0
    %160 = vmatpush1.msra.mxu0 0.0
    %161 = vmatprep.subr.mxu0 0.0
    %162 = vmatpush1.msra.mxu0 0.0
    %163 = vmatprep.subr.mxu0 0.0
    %164 = vmatpush1.msra.mxu0 0.0
    %165 = vmatprep.mubr.f32.mxu0 0.0
    %166 = vmatmul.mubr.f32.gmra.mrb[0].mxu0 %v99
    %v167 = vpop.f32.mrb[0].mxu0
    %v168 = vadd.f32 %v95, %v167
    %v169 = vpop.f32.mrb[0].mxu0
    %170 = vdwg.mxu0
    %v171 = vld [vmem:[#allocation5] sm:$0x3]
    %v172 = vld [vmem:[#allocation5 + $0x2] sm:$0x3]
    %v173 = vld [vmem:[#allocation5 + $0x4] sm:$0x3]
    %v174 = vld [vmem:[#allocation5 + $0x6] sm:$0x3]
    %v175 = vld [vmem:[#allocation5 + $0x8] sm:$0x3]
    %v176 = vld [vmem:[#allocation5 + $0xa] sm:$0x3]
    %v177 = vld [vmem:[#allocation5 + $0xc] sm:$0x3]
    %v178 = vld [vmem:[#allocation5 + $0xe] sm:$0x3]
    %v187 = vcombine.low %v171, %v172
    %v188 = vcombine.low %v173, %v174
    %v190 = vunpack.c.l.s4 1983009808
    %v191 = vunpack.c.0.s8 %v190
    %v192 = vlaneseq
    %v193 = vshrl.u32 %v192, 7
    %v194 = vsub.s32 %v191, %v193
    %v195 = vrot.slane %v187, %v194
    %v197 = vunpack.c.l.s4 1983009808
    %v198 = vunpack.c.0.s8 %v197
    %v199 = vlaneseq
    %v200 = vshrl.u32 %v199, 7
    %v201 = vsub.s32 %v198, %v200
    %v202 = vrot.slane %v188, %v201
    %v203 = vcombine.low %v195, %v202
    %v204 = vcombine.low %v175, %v176
    %v205 = vcombine.low %v177, %v178
    %v207 = vunpack.c.l.s4 1983009808
    %v208 = vunpack.c.0.s8 %v207
    %v209 = vlaneseq
    %v210 = vshrl.u32 %v209, 7
    %v211 = vsub.s32 %v208, %v210
    %v212 = vrot.slane %v204, %v211
    %v214 = vunpack.c.l.s4 1983009808
    %v215 = vunpack.c.0.s8 %v214
    %v216 = vlaneseq
    %v217 = vshrl.u32 %v216, 7
    %v218 = vsub.s32 %v215, %v217
    %v219 = vrot.slane %v205, %v218
    %v220 = vcombine.low %v212, %v219
    %v222 = vcombine.low %v168, %v168
    %v224 = vunpack.c.l.s4 1983009808
    %v225 = vunpack.c.0.s8 %v224
    %v226 = vlaneseq
    %v227 = vshrl.u32 %v226, 7
    %v228 = vsub.s32 %v225, %v227
    %v229 = vrot.slane %v222, %v228
    %v230 = vcombine.low %v229, %v229
    %v232 = vsel %vm97, %v203, 0
    %v234 = vsel %vm97, %v220, 0
    %236 = vmatprep.subr.mxu0 0.0
    %237 = vmatpush1.msra.mxu0 %v85
    %238 = vmatprep.subr.mxu0 0.0
    %239 = vmatpush1.msra.mxu0 %v86
    %240 = vmatprep.subr.mxu0 0.0
    %241 = vmatpush1.msra.mxu0 %v87
    %242 = vmatprep.subr.mxu0 0.0
    %243 = vmatpush1.msra.mxu0 %v88
    %244 = vmatprep.subr.mxu0 0.0
    %245 = vmatpush1.msra.mxu0 0.0
    %246 = vmatprep.subr.mxu0 0.0
    %247 = vmatpush1.msra.mxu0 0.0
    %248 = vmatprep.subr.mxu0 0.0
    %249 = vmatpush1.msra.mxu0 0.0
    %250 = vmatprep.subr.mxu0 0.0
    %251 = vmatpush1.msra.mxu0 0.0
    %252 = vmatprep.subr.mxu0 0.0
    %253 = vmatpush1.msra.mxu0 0.0
    %254 = vmatprep.subr.mxu0 0.0
    %255 = vmatpush1.msra.mxu0 0.0
    %256 = vmatprep.subr.mxu0 0.0
    %257 = vmatpush1.msra.mxu0 0.0
    %258 = vmatprep.subr.mxu0 0.0
    %259 = vmatpush1.msra.mxu0 0.0
    %260 = vmatprep.subr.mxu0 0.0
    %261 = vmatpush1.msra.mxu0 0.0
    %262 = vmatprep.subr.mxu0 0.0
    %263 = vmatpush1.msra.mxu0 0.0
    %264 = vmatprep.subr.mxu0 0.0
    %265 = vmatpush1.msra.mxu0 0.0
    %266 = vmatprep.subr.mxu0 0.0
    %267 = vmatpush1.msra.mxu0 0.0
    %268 = vmatprep.subr.mxu0 0.0
    %269 = vmatpush1.msra.mxu0 0.0
    %270 = vmatprep.subr.mxu0 0.0
    %271 = vmatpush1.msra.mxu0 0.0
    %272 = vmatprep.subr.mxu0 0.0
    %273 = vmatpush1.msra.mxu0 0.0
    %274 = vmatprep.subr.mxu0 0.0
    %275 = vmatpush1.msra.mxu0 0.0
    %276 = vmatprep.subr.mxu0 0.0
    %277 = vmatpush1.msra.mxu0 0.0
    %278 = vmatprep.subr.mxu0 0.0
    %279 = vmatpush1.msra.mxu0 0.0
    %280 = vmatprep.subr.mxu0 0.0
    %281 = vmatpush1.msra.mxu0 0.0
    %282 = vmatprep.subr.mxu0 0.0
    %283 = vmatpush1.msra.mxu0 0.0
    %284 = vmatprep.subr.mxu0 0.0
    %285 = vmatpush1.msra.mxu0 0.0
    %286 = vmatprep.subr.mxu0 0.0
    %287 = vmatpush1.msra.mxu0 0.0
    %288 = vmatprep.subr.mxu0 0.0
    %289 = vmatpush1.msra.mxu0 0.0
    %290 = vmatprep.subr.mxu0 0.0
    %291 = vmatpush1.msra.mxu0 0.0
    %292 = vmatprep.subr.mxu0 0.0
    %293 = vmatpush1.msra.mxu0 0.0
    %294 = vmatprep.subr.mxu0 0.0
    %295 = vmatpush1.msra.mxu0 0.0
    %296 = vmatprep.subr.mxu0 0.0
    %297 = vmatpush1.msra.mxu0 0.0
    %298 = vmatprep.subr.mxu0 0.0
    %299 = vmatpush1.msra.mxu0 0.0
    %300 = vmatprep.mubr.f32.mxu0 0.0
    %301 = vmatmul.mubr.f32.gmra.mrb[0].mxu0 %v232
    %v302 = vpop.f32.mrb[0].mxu0
    %v303 = vadd.f32 %v230, %v302
    %v304 = vpop.f32.mrb[0].mxu0
    %305 = vmatprep.mubr.f32.mxu0 0.0
    %306 = vmatmul.mubr.f32.gmra.mrb[0].mxu0 %v234
    %v307 = vpop.f32.mrb[0].mxu0
    %v308 = vadd.f32 %v230, %v307
    %v309 = vpop.f32.mrb[0].mxu0
    %310 = vdwg.mxu0
    %v313 = vcombine.high %v303, %v303
    %v315 = vunpack.c.l.s4 1983009808
    %v316 = vunpack.c.0.s8 %v315
    %v317 = vlaneseq
    %v318 = vshrl.u32 %v317, 7
    %v319 = vsub.s32 %v316, %v318
    %v320 = vrot.slane %v303, %v319
    %v322 = vunpack.c.l.s4 1983009808
    %v323 = vunpack.c.0.s8 %v322
    %v324 = vlaneseq
    %v325 = vshrl.u32 %v324, 7
    %v326 = vsub.s32 %v323, %v325
    %v327 = vrot.slane %v313, %v326
    %v328 = vcombine.high %v320, %v320
    %v329 = vcombine.high %v327, %v327
    %v330 = vcombine.high %v308, %v308
    %v332 = vunpack.c.l.s4 1983009808
    %v333 = vunpack.c.0.s8 %v332
    %v334 = vlaneseq
    %v335 = vshrl.u32 %v334, 7
    %v336 = vsub.s32 %v333, %v335
    %v337 = vrot.slane %v308, %v336
    %v339 = vunpack.c.l.s4 1983009808
    %v340 = vunpack.c.0.s8 %v339
    %v341 = vlaneseq
    %v342 = vshrl.u32 %v341, 7
    %v343 = vsub.s32 %v340, %v342
    %v344 = vrot.slane %v330, %v343
    %v345 = vcombine.high %v337, %v337
    %v346 = vcombine.high %v344, %v344
    %v355 = vtanh.pop %v320
    %v356 = vtanh.pop %v328
    %v357 = vtanh.pop %v327
    %v358 = vtanh.pop %v329
    %v359 = vtanh.pop %v337
    %v360 = vtanh.pop %v345
    %v361 = vtanh.pop %v344
    %v362 = vtanh.pop %v346
    %v364 = vlaneseq
    %v365 = vshrl.u32 %v364, 7
    %v366 = vsub.s32 0, %v365
    %v367 = vrot.slane %v90, %v366
    %v369 = vmul.f32 %v355, %v367
    %v370 = vmul.f32 %v356, %v367
    %v371 = vmul.f32 %v357, %v367
    %v372 = vmul.f32 %v358, %v367
    %v373 = vmul.f32 %v359, %v367
    %v374 = vmul.f32 %v360, %v367
    %v375 = vmul.f32 %v361, %v367
    %v376 = vmul.f32 %v362, %v367
    %vm377 = vcmask 254976
    %v378 = vsel %vm377, %v369, 0.0
    %379 = vadd.xlane.f32.xlu0 %v378
    %v380 = vpop.xlane.xlu0 %379
    %v381 = vsel %vm377, %v370, 0.0
    %382 = vadd.xlane.f32.xlu0 %v381
    %v383 = vpop.xlane.xlu0 %382
    %v384 = vsel %vm377, %v371, 0.0
    %385 = vadd.xlane.f32.xlu0 %v384
    %v386 = vpop.xlane.xlu0 %385
    %v387 = vsel %vm377, %v372, 0.0
    %388 = vadd.xlane.f32.xlu0 %v387
    %v389 = vpop.xlane.xlu0 %388
    %v390 = vsel %vm377, %v373, 0.0
    %391 = vadd.xlane.f32.xlu0 %v390
    %v392 = vpop.xlane.xlu0 %391
    %v393 = vsel %vm377, %v374, 0.0
    %394 = vadd.xlane.f32.xlu0 %v393
    %v395 = vpop.xlane.xlu0 %394
    %v396 = vsel %vm377, %v375, 0.0
    %397 = vadd.xlane.f32.xlu0 %v396
    %v398 = vpop.xlane.xlu0 %397
    %v399 = vsel %vm377, %v376, 0.0
    %400 = vadd.xlane.f32.xlu0 %v399
    %v401 = vpop.xlane.xlu0 %400
    %v410 = vlaneseq
    %v411 = vand.u32 %v410, 127
    %v412 = vlaneseq
    %v413 = vshrl.u32 %v412, 7
    %v414 = vsub.s32 %v411, %v413
    %v415 = vrot.slane %v380, %v414
    %v416 = vlaneseq
    %v417 = vshrl.u32 %v416, 7
    %v418 = vsub.s32 %v411, %v417
    %v419 = vrot.slane %v383, %v418
    %v420 = vlaneseq
    %v421 = vshrl.u32 %v420, 7
    %v422 = vsub.s32 %v411, %v421
    %v423 = vrot.slane %v386, %v422
    %v424 = vlaneseq
    %v425 = vshrl.u32 %v424, 7
    %v426 = vsub.s32 %v411, %v425
    %v427 = vrot.slane %v389, %v426
    %v428 = vlaneseq
    %v429 = vshrl.u32 %v428, 7
    %v430 = vsub.s32 %v411, %v429
    %v431 = vrot.slane %v392, %v430
    %v432 = vlaneseq
    %v433 = vshrl.u32 %v432, 7
    %v434 = vsub.s32 %v411, %v433
    %v435 = vrot.slane %v395, %v434
    %v436 = vlaneseq
    %v437 = vshrl.u32 %v436, 7
    %v438 = vsub.s32 %v411, %v437
    %v439 = vrot.slane %v398, %v438
    %v440 = vlaneseq
    %v441 = vshrl.u32 %v440, 7
    %v442 = vsub.s32 %v411, %v441
    %v443 = vrot.slane %v401, %v442
    %vm444 = vcmask 1041409
    %v445 = vsel %vm444, %v419, %v415
    %vm446 = vcmask 1042434
    %v447 = vsel %vm446, %v423, %v445
    %vm448 = vcmask 1043459
    %v449 = vsel %vm448, %v427, %v447
    %vm450 = vcmask 1044484
    %v451 = vsel %vm450, %v431, %v449
    %vm452 = vcmask 1045509
    %v453 = vsel %vm452, %v435, %v451
    %vm454 = vcmask 1046534
    %v455 = vsel %vm454, %v439, %v453
    %vm456 = vcmask 1047559
    %v457 = vsel %vm456, %v443, %v455
    %459 = vxpose.xlu0.b32.start [1/16] %v457, 128
    %460 = vxpose.xlu0.b32.cont [2/16] 0.0, 128
    %461 = vxpose.xlu0.b32.cont [3/16] 0.0, 128
    %462 = vxpose.xlu0.b32.cont [4/16] 0.0, 128
    %463 = vxpose.xlu0.b32.cont [5/16] 0.0, 128
    %464 = vxpose.xlu0.b32.cont [6/16] 0.0, 128
    %465 = vxpose.xlu0.b32.cont [7/16] 0.0, 128
    %466 = vxpose.xlu0.b32.cont [8/16] 0.0, 128
    %467 = vxpose.xlu0.b32.cont [9/16] 0.0, 128
    %468 = vxpose.xlu0.b32.cont [10/16] 0.0, 128
    %469 = vxpose.xlu0.b32.cont [11/16] 0.0, 128
    %470 = vxpose.xlu0.b32.cont [12/16] 0.0, 128
    %471 = vxpose.xlu0.b32.cont [13/16] 0.0, 128
    %472 = vxpose.xlu0.b32.cont [14/16] 0.0, 128
    %473 = vxpose.xlu0.b32.cont [15/16] 0.0, 128
    %474 = vxpose.xlu0.b32.end [16/16] 0.0, 128
    %v475 = vpop.trf.xlu0
    %v476 = vpop.trf.xlu0
    %v477 = vpop.trf.xlu0
    %v478 = vpop.trf.xlu0
    %v479 = vpop.trf.xlu0
    %v480 = vpop.trf.xlu0
    %v481 = vpop.trf.xlu0
    %v482 = vpop.trf.xlu0
    %v483 = vpop.trf.xlu0
    %v484 = vpop.trf.xlu0
    %v485 = vpop.trf.xlu0
    %v486 = vpop.trf.xlu0
    %v487 = vpop.trf.xlu0
    %v488 = vpop.trf.xlu0
    %v489 = vpop.trf.xlu0
    %v490 = vpop.trf.xlu0
    %v491 = vld [vmem:[%s6] sm:$0x3]
    %v492 = vadd.f32 %v475, %v491
    %vm493 = vcmask 58368
    %v494 = vsel %vm493, %v492, -inf
    %495 = vmax.xlane.f32.xlu0 %v494
    %v496 = vpop.xlane.xlu0 %495
    %v497 = vsub.f32 %v492, %v496
    %v498 = vmul.f32 %v497, 1.442695
    %v499 = vpow.pop %v498
    %v500 = vsel %vm493, %v499, 0.0
    %501 = vadd.xlane.f32.xlu0 %v500
    %v502 = vpop.xlane.xlu0 %501
    %v503 = vrcp.pop %v502
    %v504 = vmul.f32 %v499, %v503
    %505 = vst.msk [vmem:[#allocation10] sm:$0x3] %vm493, %v504
    // Predicated region
    $region46: #{tpu_custom_call.1} parent=1 // pred_check
      _
    $region47: #{tpu_custom_call.1} parent=1 // pred_check_branch
      %507 = sbr.rel (0) target = $region49
    $region48: #{tpu_custom_call.1} parent=1 // pred_region
      %s509 = ssub.s32 32, 32
      %510 = vsyncadd [#allocation4], %s509
      %s512 = sshll.u32 [#allocation10], 4
      %s513 = int_to_ptr.vmem [resolvable:$true] %s512
      %515 = dma.vmem_to_hbm [thread:$0]  %s513, 32, %s7, [#allocation4]
    $region49: #{tpu_custom_call.1} parent=1 // pred_fallthru
      _
    // Predicated region
    $region50: #{tpu_custom_call.1} parent=1 // pred_check
      _
    $region51: #{tpu_custom_call.1} parent=1 // pred_check_branch
      %517 = sbr.rel (0) target = $region53
    $region52: #{tpu_custom_call.1} parent=1 // pred_region
      %518 = dma.done [#allocation4], 32
    $region53: #{tpu_custom_call.1} parent=1 // pred_fallthru
      _
    %519 = vsyncpa [#allocation3], 1
    %520 = vsyncpa [#allocation6], 1
    %521 = vsyncpa [#allocation9], 1
    %522 = vsyncpa [#allocation4], 1

</llo_original>
